<compile_context>
chip_gen: v5e
topology: v5e:2x2
jax: 0.10.0
libtpu: 0.0.40
codegen_flags: <defaults>
</compile_context>

<pallas_src>
import functools
import math

import jax
import jax.numpy as jnp
from jax import lax
from jax.experimental import pallas as pl
from jax.experimental.pallas import tpu as pltpu


def _round_up(x, m):
    return (x + m - 1) // m * m


def _vmem_capacity_bytes():
    """Per-core VMEM capacity; conservative fallback (v7x) if the query fails."""
    try:
        info = pltpu.get_tpu_info()
        cap = getattr(info, "vmem_capacity_bytes", None)
        if cap:
            return int(cap)
    except Exception:
        pass
    return 64 * 1024 * 1024


# --------------------------- projection kernels ---------------------------

def _q_proj_kernel(x_ref, w_ref, b_ref, q_ref, *, num_heads, head_dim):
    """q = x @ Wq^T + bq, emitted head-major (H, tile, dk)."""
    x = x_ref[0]                                                       # (tile, Din) bf16
    q = jnp.dot(x, w_ref[...], preferred_element_type=jnp.float32) + b_ref[...]
    q = q.astype(q_ref.dtype)
    # Head split happens ONCE here (amortized over all attention q-tiles), so the
    # attention kernel never performs lane-masked sub-128 slices.
    for h in range(num_heads):
        q_ref[0, h] = q[:, h * head_dim:(h + 1) * head_dim]


def _kv_proj_kernel(ao_ref, wk_ref, bk_ref, wv_ref, bv_ref, k_ref, v_ref, *,
                    num_heads, key_dim, value_dim):
    """K/V projections, computed once per batch element (not per q-tile), head-major."""
    ao = ao_ref[0]                                                     # (tile, Dkv) bf16
    k = (jnp.dot(ao, wk_ref[...], preferred_element_type=jnp.float32) + bk_ref[...]).astype(k_ref.dtype)
    v = (jnp.dot(ao, wv_ref[...], preferred_element_type=jnp.float32) + bv_ref[...]).astype(v_ref.dtype)
    for h in range(num_heads):
        k_ref[0, h] = k[:, h * key_dim:(h + 1) * key_dim]
        v_ref[0, h] = v[:, h * value_dim:(h + 1) * value_dim]


# ---------------------------- attention kernel ----------------------------

def _attn_kernel(q_ref, k_ref, v_ref, bias_ref, wo_ref, bo_ref,
                 ctx_ref, attn_ref, *, num_heads, inv_temperature, approx_recip):
    """One grid step = one (batch, q-tile): head-batched scores, softmax, context, Wo."""
    q = q_ref[0]           # (H, tq, dk)  bf16
    k = k_ref[0]           # (H, Lk, dk)  bf16
    v = v_ref[0]           # (H, Lk, dv)  bf16
    bias = bias_ref[0]     # (1, Lk)      f32 additive mask bias (0 keep / -1e30 masked)

    # head-batched scores: one dot_general over all heads (batch dim 0)
    sim = lax.dot_general(q, k, (((2,), (2,)), ((0,), (0,))),
                          preferred_element_type=jnp.float32)          # (H, tq, Lk)
    sim = sim * inv_temperature + bias                                 # bias broadcasts over (H, tq)

    # softmax entirely in f32 (v5e VPU/EUP have no bf16 path); EUP exp + reciprocal
    m = jnp.max(sim, axis=-1, keepdims=True)
    p = jnp.exp(sim - m)
    denom = jnp.sum(p, axis=-1, keepdims=True)
    if approx_recip:
        attn = p * pl.reciprocal(denom, approx=True)
    else:
        attn = p / denom
    # lane-dense (H, tq, Lk) slab store (bf16 by default)
    attn_ref[0] = attn.astype(attn_ref.dtype)

    # head-batched context: (H, tq, Lk) @ (H, Lk, dv) -> (H, tq, dv)
    ctx_h = lax.dot_general(attn.astype(jnp.bfloat16), v, (((2,), (1,)), ((0,), (0,))),
                            preferred_element_type=jnp.float32)

    # output projection folded per head: out = sum_h ctx_h @ Wo_h^T + bo
    out_h = lax.dot_general(ctx_h.astype(jnp.bfloat16), wo_ref[...],
                            (((2,), (1,)), ((0,), (0,))),
                            preferred_element_type=jnp.float32)        # (H, tq, Dout)
    out = out_h[0]
    for h in range(1, num_heads):                                      # slab adds on the VPU
        out = out + out_h[h]
    ctx_ref[0] = (out + bo_ref[...]).astype(ctx_ref.dtype)


# -------------------------------- wrapper ---------------------------------

def multi_head_attention(x, attend_over, attend_mask, params, *, num_heads,
                         temperature=None, q_tile=None, attn_dtype=jnp.bfloat16,
                         attn_head_major=False, approx_recip=True):
    B, Lq, Din = x.shape
    _, Lk, Dkv = attend_over.shape
    wq, bq = params["wq"], params["bq"]
    wk, bk = params["wk"], params["bk"]
    wv, bv = params["wv"], params["bv"]
    wo, bo = params["wo"], params["bo"]
    Datt = wq.shape[0]
    Dval = wv.shape[0]
    Dout = wo.shape[0]
    dk = Datt // num_heads
    dv = Dval // num_heads
    temp = float(temperature) if temperature is not None else math.sqrt(dk)
    inv_temp = 1.0 / temp
    bf = jnp.bfloat16

    # --- generation-aware VMEM budget (v7x: ~50 MiB of 64; v5e/v6e: ~100 MiB of 128) ---
    vmem_cap = _vmem_capacity_bytes()
    vmem_budget = min(int(vmem_cap * 0.78), 100 * 1024 * 1024)

    # --- KV sequence padding & projection tile ---
    tk = min(256, _round_up(Lk, 8))
    Lk_pad = _round_up(Lk, tk)
    n_k = Lk_pad // tk

    # --- pick the q tile so the attention step fits the budget (double-buffered) ---
    attn_item = jnp.dtype(attn_dtype).itemsize

    def est_attn_vmem(tq_):
        blocks = (2 * num_heads * tq_ * dk * 2          # q tile
                  + 2 * num_heads * Lk_pad * dk * 2     # K
                  + 2 * num_heads * Lk_pad * dv * 2     # V
                  + 2 * Lk_pad * 4                      # mask bias
                  + 2 * num_heads * dv * Dout * 2       # Wo (head-major)
                  + 2 * Dout * 4                        # bo
                  + 2 * tq_ * Dout * 4                  # ctx out
                  + 2 * num_heads * tq_ * Lk_pad * attn_item)  # attn out
        temps = (2 * num_heads * tq_ * Lk_pad * 4       # sim / p (f32)
                 + num_heads * tq_ * Lk_pad * 2         # p (bf16)
                 + num_heads * tq_ * dv * 4
                 + num_heads * tq_ * Dout * 4)
        return blocks + temps

    if q_tile is None:
        q_tile = 256 if vmem_cap >= 96 * 1024 * 1024 else 128   # bigger tiles on v5e/v6e
    tq = min(_round_up(int(q_tile), 8), _round_up(Lq, 8))
    while tq > 8 and est_attn_vmem(tq) > vmem_budget:
        tq = _round_up(max(8, tq // 2), 8)
    Lq_pad = _round_up(Lq, tq)
    n_q = Lq_pad // tq

    est = est_attn_vmem(tq)
    vmem_limit = int(max(vmem_budget, min(est * 1.2, 0.92 * vmem_cap)))

    # --- pad sequences to tile multiples (padded keys are masked out below) ---
    x_p = jnp.pad(x, ((0, 0), (0, Lq_pad - Lq), (0, 0))) if Lq_pad != Lq else x
    ao_p = (jnp.pad(attend_over, ((0, 0), (0, Lk_pad - Lk), (0, 0)))
            if Lk_pad != Lk else attend_over)

    # additive mask bias precomputed in the wrapper (one add in-kernel)
    if attend_mask is None:
        mask = jnp.ones((B, Lk), jnp.float32)
    else:
        mask = attend_mask.astype(jnp.float32)
    if Lk_pad != Lk:
        mask = jnp.pad(mask, ((0, 0), (0, Lk_pad - Lk)))
    mask_bias = jnp.where(mask.reshape(B, 1, Lk_pad) > 0, 0.0, -1e30).astype(jnp.float32)

    # --- cast to bf16, pre-transpose weights (PyTorch Linear: y = x @ W^T + b) ---
    x_bf = x_p.astype(bf)
    ao_bf = ao_p.astype(bf)
    wq_t = wq.T.astype(bf)                               # (Din, Datt)
    wk_t = wk.T.astype(bf)                               # (Dkv, Datt)
    wv_t = wv.T.astype(bf)                               # (Dkv, Dval)
    wo3 = wo.T.reshape(num_heads, dv, Dout).astype(bf)   # (H, dv, Dout)
    bq2 = bq.reshape(1, Datt).astype(jnp.float32)
    bk2 = bk.reshape(1, Datt).astype(jnp.float32)
    bv2 = bv.reshape(1, Dval).astype(jnp.float32)
    bo2 = bo.reshape(1, Dout).astype(jnp.float32)

    proj_params = pltpu.CompilerParams(
        dimension_semantics=("parallel", "parallel"),
        vmem_limit_bytes=int(vmem_budget))

    # ---- Q projection (head-major output, computed once over Lq) ----
    q_heads = pl.pallas_call(
        functools.partial(_q_proj_kernel, num_heads=num_heads, head_dim=dk),
        out_shape=jax.ShapeDtypeStruct((B, num_heads, Lq_pad, dk), bf),
        grid_spec=pltpu.PrefetchScalarGridSpec(
            num_scalar_prefetch=0, grid=(B, n_q),
            in_specs=[pl.BlockSpec((1, tq, Din), lambda b, i: (b, i, 0)),
                      pl.BlockSpec((Din, Datt), lambda b, i: (0, 0)),
                      pl.BlockSpec((1, Datt), lambda b, i: (0, 0))],
            out_specs=pl.BlockSpec((1, num_heads, tq, dk), lambda b, i: (b, 0, i, 0))),
        compiler_params=proj_params,
    )(x_bf, wq_t, bq2)

    # ---- K/V projections (once per batch element, NOT per q-tile) ----
    k_heads, v_heads = pl.pallas_call(
        functools.partial(_kv_proj_kernel, num_heads=num_heads, key_dim=dk, value_dim=dv),
        out_shape=[jax.ShapeDtypeStruct((B, num_heads, Lk_pad, dk), bf),
                   jax.ShapeDtypeStruct((B, num_heads, Lk_pad, dv), bf)],
        grid_spec=pltpu.PrefetchScalarGridSpec(
            num_scalar_prefetch=0, grid=(B, n_k),
            in_specs=[pl.BlockSpec((1, tk, Dkv), lambda b, i: (b, i, 0)),
                      pl.BlockSpec((Dkv, Datt), lambda b, i: (0, 0)),
                      pl.BlockSpec((1, Datt), lambda b, i: (0, 0)),
                      pl.BlockSpec((Dkv, Dval), lambda b, i: (0, 0)),
                      pl.BlockSpec((1, Dval), lambda b, i: (0, 0))],
            out_specs=[pl.BlockSpec((1, num_heads, tk, dk), lambda b, i: (b, 0, i, 0)),
                       pl.BlockSpec((1, num_heads, tk, dv), lambda b, i: (b, 0, i, 0))]),
        compiler_params=proj_params,
    )(ao_bf, wk_t, bk2, wv_t, bv2)

    # ---- attention + output projection ----
    kernel = functools.partial(_attn_kernel, num_heads=num_heads,
                               inv_temperature=inv_temp, approx_recip=approx_recip)
    ctx, attn_hm = pl.pallas_call(
        kernel,
        out_shape=[jax.ShapeDtypeStruct((B, Lq_pad, Dout), jnp.float32),
                   jax.ShapeDtypeStruct((B, num_heads, Lq_pad, Lk_pad), attn_dtype)],
        grid_spec=pltpu.PrefetchScalarGridSpec(
            num_scalar_prefetch=0, grid=(B, n_q),
            in_specs=[pl.BlockSpec((1, num_heads, tq, dk), lambda b, i: (b, 0, i, 0)),
                      pl.BlockSpec((1, num_heads, Lk_pad, dk), lambda b, i: (b, 0, 0, 0)),
                      pl.BlockSpec((1, num_heads, Lk_pad, dv), lambda b, i: (b, 0, 0, 0)),
                      pl.BlockSpec((1, 1, Lk_pad), lambda b, i: (b, 0, 0)),
                      pl.BlockSpec((num_heads, dv, Dout), lambda b, i: (0, 0, 0)),
                      pl.BlockSpec((1, Dout), lambda b, i: (0, 0))],
            out_specs=[pl.BlockSpec((1, tq, Dout), lambda b, i: (b, i, 0)),
                       pl.BlockSpec((1, num_heads, tq, Lk_pad), lambda b, i: (b, 0, i, 0))]),
        compiler_params=pltpu.CompilerParams(
            dimension_semantics=("parallel", "parallel"),
            vmem_limit_bytes=vmem_limit),
    )(q_heads, k_heads, v_heads, mask_bias, wo3, bo2)

    ctx = ctx[:, :Lq]
    attn_hm = attn_hm[:, :, :Lq, :Lk]
    if attn_head_major:
        return ctx, attn_hm                              # (B, H, Lq, Lk), no extra transpose
    # XLA layout plumbing to match the PyTorch output: (B, H, Lq, Lk) -> (B, Lq, H, Lk)
    return ctx, jnp.transpose(attn_hm, (0, 2, 1, 3))


# ------------------------------- reference --------------------------------

def _reference(x, attend_over, attend_mask, params, *, num_heads, temperature=None):
    """Pure-JAX f32 reference mirroring the PyTorch forward (eval mode, dropout=0)."""
    wq, bq = params["wq"], params["bq"]
    wk, bk = params["wk"], params["bk"]
    wv, bv = params["wv"], params["bv"]
    wo, bo = params["wo"], params["bo"]
    B, Lq, _ = x.shape
    _, Lk, _ = attend_over.shape
    Datt = wq.shape[0]
    Dval = wv.shape[0]
    dk = Datt // num_heads
    dv = Dval // num_heads
    temp = float(temperature) if temperature is not None else math.sqrt(dk)

    q = x @ wq.T + bq
    k = attend_over @ wk.T + bk
    v = attend_over @ wv.T + bv
    q = q.reshape(B, Lq, num_heads, dk).transpose(0, 2, 1, 3)   # (B,H,Lq,dk)
    k = k.reshape(B, Lk, num_heads, dk).transpose(0, 2, 3, 1)   # (B,H,dk,Lk)
    v = v.reshape(B, Lk, num_heads, dv).transpose(0, 2, 1, 3)   # (B,H,Lk,dv)
    sim = jnp.matmul(q, k) / temp                               # (B,H,Lq,Lk)
    if attend_mask is not None:
        m = attend_mask[:, None, None, :]
        sim = jnp.where(m > 0, sim, -1e30)
    attn = jax.nn.softmax(sim, axis=-1)
    ctx_h = jnp.matmul(attn, v)                                 # (B,H,Lq,dv)
    ctx = ctx_h.transpose(0, 2, 1, 3).reshape(B, Lq, Dval)
    ctx = ctx @ wo.T + bo
    return ctx, attn.transpose(0, 2, 1, 3)


def _init_linear(key, out_dim, in_dim):
    kw, kb = jax.random.split(key)
    bound = 1.0 / math.sqrt(in_dim)
    w = jax.random.uniform(kw, (out_dim, in_dim), jnp.float32, -bound, bound)
    b = jax.random.uniform(kb, (out_dim,), jnp.float32, -bound, bound)
    return w, b


if __name__ == "__main__":
    # Small config: num_heads=4, input_dim=attend_to_dim=total_attention_dim=total_value_dim=32
    B, Lq, Lk = 2, 8, 8
    input_dim = attend_to_dim = total_attention_dim = total_value_dim = output_dim = 32
    num_heads = 4

    key = jax.random.PRNGKey(0)
    k_x, k_ao, kq, kk, kv, ko = jax.random.split(key, 6)
    x = jax.random.normal(k_x, (B, Lq, input_dim), jnp.float32)
    attend_over = jax.random.normal(k_ao, (B, Lk, attend_to_dim), jnp.float32)
    # mask out the last two attend positions of batch 1
    attend_mask = jnp.ones((B, Lk), jnp.float32).at[1, Lk - 2:].set(0.0)

    # NOTE: with these (all-equal) dims the PyTorch module would use "cloned" linears
    # (identical init for K/V/Q/O); weights are synthetic here so each projection is
    # initialized independently — forward semantics are unchanged.
    wq, bq = _init_linear(kq, total_attention_dim, input_dim)
    wk, bk = _init_linear(kk, total_attention_dim, attend_to_dim)
    wv, bv = _init_linear(kv, total_value_dim, attend_to_dim)
    wo, bo = _init_linear(ko, output_dim, total_value_dim)
    params = dict(wq=wq, bq=bq, wk=wk, bk=bk, wv=wv, bv=bv, wo=wo, bo=bo)

    ctx, attn = multi_head_attention(x, attend_over, attend_mask, params, num_heads=num_heads)
    ctx, attn = jax.block_until_ready((ctx, attn))

    ctx_ref, attn_ref = _reference(x, attend_over, attend_mask, params, num_heads=num_heads)
    assert ctx.shape == (B, Lq, output_dim)
    assert attn.shape == (B, Lq, num_heads, Lk)
    # bf16 MXU inputs, bf16 attention output + approx reciprocal -> relaxed tolerances
    assert jnp.allclose(ctx, ctx_ref, atol=5e-2, rtol=5e-2)
    assert jnp.allclose(attn.astype(jnp.float32), attn_ref, atol=5e-2, rtol=5e-2)

    print("KERNEL_OK")
</pallas_src>

<mosaic_0001>
module attributes {stable_mosaic.version = 11 : i64} {
  func.func @_q_proj_kernel(%arg0: i32, %arg1: i32, %arg2: memref<1x8x32xbf16, #tpu.memory_space<vmem>>, %arg3: memref<32x32xbf16, #tpu.memory_space<vmem>>, %arg4: memref<1x32xf32, #tpu.memory_space<vmem>>, %arg5: memref<1x4x8x8xbf16, #tpu.memory_space<vmem>>) attributes {dimension_semantics = [#tpu.dimension_semantics<parallel>, #tpu.dimension_semantics<parallel>], iteration_bounds = array<i64: 2, 1>, scalar_prefetch = 0 : i64, scratch_operands = 0 : i64, tpu.core_type = #tpu.core_type<tc>, window_params = [{transform_indices = @transform_0, window_bounds = array<i64: 1, 8, 32>}, {pipeline_mode = #tpu.pipeline_mode<synchronous>, transform_indices = @transform_1, window_bounds = array<i64: 32, 32>}, {pipeline_mode = #tpu.pipeline_mode<synchronous>, transform_indices = @transform_2, window_bounds = array<i64: 1, 32>}, {transform_indices = @transform_3, window_bounds = array<i64: 1, 4, 8, 8>}]} {
    %c0 = arith.constant 0 : index
    %c0_0 = arith.constant 0 : index
    %c0_1 = arith.constant 0 : index
    %0 = vector.load %arg2[%c0, %c0_0, %c0_1] : memref<1x8x32xbf16, #tpu.memory_space<vmem>>, vector<1x8x32xbf16>
    %1 = vector.shape_cast %0 : vector<1x8x32xbf16> to vector<8x32xbf16>
    %c0_2 = arith.constant 0 : index
    %c0_3 = arith.constant 0 : index
    %2 = vector.load %arg3[%c0_2, %c0_3] : memref<32x32xbf16, #tpu.memory_space<vmem>>, vector<32x32xbf16>
    %cst = arith.constant dense<0.000000e+00> : vector<8x32xf32>
    %3 = tpu.matmul %1, %2, %cst {dimension_numbers = #tpu.dot_dimension_numbers<[1], [0], [0], [1], [0, 0, 1, 1], [], []>} : vector<8x32xbf16>, vector<32x32xbf16>, vector<8x32xf32> -> vector<8x32xf32>
    %c0_4 = arith.constant 0 : index
    %c0_5 = arith.constant 0 : index
    %4 = vector.load %arg4[%c0_4, %c0_5] : memref<1x32xf32, #tpu.memory_space<vmem>>, vector<1x32xf32>
    %5 = vector.broadcast %4 : vector<1x32xf32> to vector<8x32xf32>
    %6 = arith.addf %3, %5 : vector<8x32xf32>
    %7 = arith.truncf %6 : vector<8x32xf32> to vector<8x32xbf16>
    %8 = vector.extract_strided_slice %7 {offsets = [0, 0], sizes = [8, 8], strides = [1, 1]} : vector<8x32xbf16> to vector<8x8xbf16>
    %c0_6 = arith.constant 0 : index
    %c0_7 = arith.constant 0 : index
    %c0_8 = arith.constant 0 : index
    %c0_9 = arith.constant 0 : index
    %9 = vector.load %arg5[%c0_6, %c0_7, %c0_8, %c0_9] : memref<1x4x8x8xbf16, #tpu.memory_space<vmem>>, vector<1x1x8x8xbf16>
    %10 = vector.shape_cast %9 : vector<1x1x8x8xbf16> to vector<8x8xbf16>
    %11 = vector.shape_cast %8 : vector<8x8xbf16> to vector<1x1x8x8xbf16>
    tpu.vector_store %arg5[%c0_6, %c0_7, %c0_8, %c0_9], %11 {strides = array<i32>} : memref<1x4x8x8xbf16, #tpu.memory_space<vmem>>, vector<1x1x8x8xbf16>,
    %12 = vector.extract_strided_slice %7 {offsets = [0, 8], sizes = [8, 8], strides = [1, 1]} : vector<8x32xbf16> to vector<8x8xbf16>
    %c0_10 = arith.constant 0 : index
    %c1 = arith.constant 1 : index
    %c0_11 = arith.constant 0 : index
    %c0_12 = arith.constant 0 : index
    %13 = vector.load %arg5[%c0_10, %c1, %c0_11, %c0_12] : memref<1x4x8x8xbf16, #tpu.memory_space<vmem>>, vector<1x1x8x8xbf16>
    %14 = vector.shape_cast %13 : vector<1x1x8x8xbf16> to vector<8x8xbf16>
    %15 = vector.shape_cast %12 : vector<8x8xbf16> to vector<1x1x8x8xbf16>
    tpu.vector_store %arg5[%c0_10, %c1, %c0_11, %c0_12], %15 {strides = array<i32>} : memref<1x4x8x8xbf16, #tpu.memory_space<vmem>>, vector<1x1x8x8xbf16>,
    %16 = vector.extract_strided_slice %7 {offsets = [0, 16], sizes = [8, 8], strides = [1, 1]} : vector<8x32xbf16> to vector<8x8xbf16>
    %c0_13 = arith.constant 0 : index
    %c2 = arith.constant 2 : index
    %c0_14 = arith.constant 0 : index
    %c0_15 = arith.constant 0 : index
    %17 = vector.load %arg5[%c0_13, %c2, %c0_14, %c0_15] : memref<1x4x8x8xbf16, #tpu.memory_space<vmem>>, vector<1x1x8x8xbf16>
    %18 = vector.shape_cast %17 : vector<1x1x8x8xbf16> to vector<8x8xbf16>
    %19 = vector.shape_cast %16 : vector<8x8xbf16> to vector<1x1x8x8xbf16>
    tpu.vector_store %arg5[%c0_13, %c2, %c0_14, %c0_15], %19 {strides = array<i32>} : memref<1x4x8x8xbf16, #tpu.memory_space<vmem>>, vector<1x1x8x8xbf16>,
    %20 = vector.extract_strided_slice %7 {offsets = [0, 24], sizes = [8, 8], strides = [1, 1]} : vector<8x32xbf16> to vector<8x8xbf16>
    %c0_16 = arith.constant 0 : index
    %c3 = arith.constant 3 : index
    %c0_17 = arith.constant 0 : index
    %c0_18 = arith.constant 0 : index
    %21 = vector.load %arg5[%c0_16, %c3, %c0_17, %c0_18] : memref<1x4x8x8xbf16, #tpu.memory_space<vmem>>, vector<1x1x8x8xbf16>
    %22 = vector.shape_cast %21 : vector<1x1x8x8xbf16> to vector<8x8xbf16>
    %23 = vector.shape_cast %20 : vector<8x8xbf16> to vector<1x1x8x8xbf16>
    tpu.vector_store %arg5[%c0_16, %c3, %c0_17, %c0_18], %23 {strides = array<i32>} : memref<1x4x8x8xbf16, #tpu.memory_space<vmem>>, vector<1x1x8x8xbf16>,
    return
  }
  func.func @transform_0(%arg0: i32, %arg1: i32) -> (i32, i32, i32) {
    %c0_i32 = arith.constant 0 : i32
    %c0_i32_0 = arith.constant 0 : i32
    return %arg0, %arg1, %c0_i32 : i32, i32, i32
  }
  func.func @transform_1(%arg0: i32, %arg1: i32) -> (i32, i32) {
    %c0_i32 = arith.constant 0 : i32
    %c0_i32_0 = arith.constant 0 : i32
    %c0_i32_1 = arith.constant 0 : i32
    return %c0_i32, %c0_i32_0 : i32, i32
  }
  func.func @transform_2(%arg0: i32, %arg1: i32) -> (i32, i32) {
    %c0_i32 = arith.constant 0 : i32
    %c0_i32_0 = arith.constant 0 : i32
    %c0_i32_1 = arith.constant 0 : i32
    return %c0_i32, %c0_i32_0 : i32, i32
  }
  func.func @transform_3(%arg0: i32, %arg1: i32) -> (i32, i32, i32, i32) {
    %c0_i32 = arith.constant 0 : i32
    %c0_i32_0 = arith.constant 0 : i32
    %c0_i32_1 = arith.constant 0 : i32
    return %arg0, %c0_i32, %arg1, %c0_i32_0 : i32, i32, i32, i32
  }
}

</mosaic_0001>

<llo_original>
// kernel: tpu_custom_call.1
$region0: #{tpu_custom_call.1}
  #allocation0 [shape = 'u32[]', space=smem, size = 0x4, offset = 0x4, fixed_abs, tag = 'smem constant byte address 0x4 - core index']
  #allocation1 [shape = 'u32[72,128]{1,0:T(1,128)}', space=vmem, size = 0x9000, scoped, tag = 'internal scratch']
  %s0 = inlined_call_operand.hbm [shape: bf16[2,8,32], index: 0, kind: input, shape index: {}]
  %s1 = inlined_call_operand.hbm [shape: bf16[32,32], index: 1, kind: input, shape index: {}]
  %s2 = inlined_call_operand.vmem [shape: f32[1,32], index: 2, kind: input, shape index: {}]
  %s3 = inlined_call_operand.hbm [shape: bf16[2,4,8,8], index: 3, kind: output, shape index: {}]
  %s4 = sld [smem:[#allocation0]]
  $region53: #{tpu_custom_call.1} parent=0
    _
  %s6 = ssub.s32 1, %s4
  %s7 = scalar_select 0, %s6, %s4
  $region1: #{tpu_custom_call.1} parent=0
    #allocation2 [shape = 'u8[4096]{0}', space=vmem, size = 0x1000, scoped, tag = 'input window, operand 0']
    #allocation3 [shape = 's32[2]{0}', space=sflag, size = 0x8, scoped, tag = 'scoped memory for tpu_custom_call.1']
    #allocation4 [shape = 's32[2]{0}', space=sflag, size = 0x8, scoped, tag = 'scoped memory for tpu_custom_call.1']
    #allocation5 [shape = 'u8[8192]{0}', space=vmem, size = 0x2000, scoped, tag = 'input window, operand 1, single buffered']
    #allocation6 [shape = 's32[1]{0}', space=sflag, size = 0x4, scoped, tag = 'scoped memory for tpu_custom_call.1']
    #allocation7 [shape = 'u8[16384]{0}', space=vmem, size = 0x4000, scoped, tag = 'output window, operand 0']
    %8 = vsyncpa [#allocation3], 0
    %s9 = scalar_lea.sflag [#allocation3], 1
    %10 = vsyncpa %s9, 0
    %11 = vsyncpa [#allocation6], 0
    %12 = vsyncpa [#allocation4], 0
    %s13 = scalar_lea.sflag [#allocation4], 1
    %14 = vsyncpa %s13, 0
    loop: start=0, step=1, limit=4
    $region2: #{tpu_custom_call.1} parent=1 // loop_pre_header
      _
    $region3: #{tpu_custom_call.1} parent=1 // loop_header
      %s16 = sphi 0, %s20
      %p17 = scmp.ge.s32.totalorder %s16, 4
      %s23 = sphi 0, %s35
      %s24 = sphi 0, %s31
      %s25 = sphi 0, %s23
      %s26 = sphi 0, %s24
      %s27 = sphi 0, %s25
      %s28 = sphi 0, %s26
      %s40 = sphi 0, %s42
      %s43 = sphi 0, %s40
      %s44 = sphi 0, %s43
      %s60 = sphi 0, %s44
      %s64 = sphi 0, %s64
      %s66 = sphi 0, %s64
      %s67 = sphi 0, %s66
      %s81 = sphi 0, %s67
      %s85 = sphi 0, %s85
      %s87 = sphi 0, %s85
      %s88 = sphi 0, %s87
      %s102 = sphi 0, %s88
      %s110 = sphi 0, %s112
      %s113 = sphi 0, %s110
      %s114 = sphi 0, %s113
      %s130 = sphi 0, %s114
    $region4: #{tpu_custom_call.1} parent=1 // loop_header_branch
      %19 = sbr.rel (%p17) target = $region8
    $region5: #{tpu_custom_call.1} parent=1 // loop_body
      %s21 = ssub.s32 %s16, 1
      %s22 = ssub.s32 %s16, 2
      %s29 = sadd.s32 1, %s24
      %p30 = scmp.ge.s32.totalorder %s29, 1
      %s31 = scalar_select %p30, 0, %s29
      %s32 = sadd.s32 1, %s23
      %s33 = scalar_select %p30, %s32, %s23
      %p34 = scmp.ge.s32.totalorder %s33, 2
      %s35 = scalar_select %p34, 0, %s33
      %s36 = ssub.s32 %s23, %s35
      %s37 = ssub.s32 %s24, %s31
      %s38 = sor.u32 %s36, %s37
      %p39 = scmp.eq.s32.totalorder %s38, 0
      %s41 = sadd.s32 %s40, 1
      %s42 = scalar_select %p39, %s40, %s41
      %p45 = pneg %p39
      %p46 = scmp.eq.s32.totalorder %s16, 1
      %p47 = por %p45, %p46
      %p48 = scmp.ne.s32.totalorder %s40, %s43
      %p49 = scmp.eq.s32.totalorder %s16, 0
      %p50 = por %p48, %p49
      %p51 = scmp.ne.s32.totalorder %s40, %s43
      %p52 = scmp.eq.s32.totalorder %s21, 1
      %p53 = por %p51, %p52
      %p54 = scmp.ne.s32.totalorder %s43, %s44
      %p55 = scmp.eq.s32.totalorder %s21, 0
      %p56 = por %p54, %p55
      %p57 = scmp.ne.s32.totalorder %s43, %s44
      %p58 = scmp.eq.s32.totalorder %s22, 1
      %p59 = por %p57, %p58
      %p61 = scmp.ne.s32.totalorder %s44, %s60
      %p62 = scmp.eq.s32.totalorder %s22, 0
      %p63 = por %p61, %p62
      %s65 = sadd.s32 %s64, 1
      %p68 = scmp.eq.s32.totalorder %s16, 1
      %p69 = scmp.ne.s32.totalorder %s64, %s66
      %p70 = scmp.eq.s32.totalorder %s16, 0
      %p71 = por %p69, %p70
      %p72 = scmp.ne.s32.totalorder %s64, %s66
      %p73 = scmp.eq.s32.totalorder %s21, 1
      %p74 = por %p72, %p73
      %p75 = scmp.ne.s32.totalorder %s66, %s67
      %p76 = scmp.eq.s32.totalorder %s21, 0
      %p77 = por %p75, %p76
      %p78 = scmp.ne.s32.totalorder %s66, %s67
      %p79 = scmp.eq.s32.totalorder %s22, 1
      %p80 = por %p78, %p79
      %p82 = scmp.ne.s32.totalorder %s67, %s81
      %p83 = scmp.eq.s32.totalorder %s22, 0
      %p84 = por %p82, %p83
      %s86 = sadd.s32 %s85, 1
      %p89 = scmp.eq.s32.totalorder %s16, 1
      %p90 = scmp.ne.s32.totalorder %s85, %s87
      %p91 = scmp.eq.s32.totalorder %s16, 0
      %p92 = por %p90, %p91
      %p93 = scmp.ne.s32.totalorder %s85, %s87
      %p94 = scmp.eq.s32.totalorder %s21, 1
      %p95 = por %p93, %p94
      %p96 = scmp.ne.s32.totalorder %s87, %s88
      %p97 = scmp.eq.s32.totalorder %s21, 0
      %p98 = por %p96, %p97
      %p99 = scmp.ne.s32.totalorder %s87, %s88
      %p100 = scmp.eq.s32.totalorder %s22, 1
      %p101 = por %p99, %p100
      %p103 = scmp.ne.s32.totalorder %s88, %s102
      %p104 = scmp.eq.s32.totalorder %s22, 0
      %p105 = por %p103, %p104
      %s106 = ssub.s32 %s23, %s35
      %s107 = ssub.s32 %s24, %s31
      %s108 = sor.u32 %s106, %s107
      %p109 = scmp.eq.s32.totalorder %s108, 0
      %s111 = sadd.s32 %s110, 1
      %s112 = scalar_select %p109, %s110, %s111
      %p115 = pneg %p109
      %p116 = scmp.eq.s32.totalorder %s16, 1
      %p117 = por %p115, %p116
      %p118 = scmp.ne.s32.totalorder %s110, %s113
      %p119 = scmp.eq.s32.totalorder %s16, 0
      %p120 = por %p118, %p119
      %p121 = scmp.ne.s32.totalorder %s110, %s113
      %p122 = scmp.eq.s32.totalorder %s21, 1
      %p123 = por %p121, %p122
      %p124 = scmp.ne.s32.totalorder %s113, %s114
      %p125 = scmp.eq.s32.totalorder %s21, 0
      %p126 = por %p124, %p125
      %p127 = scmp.ne.s32.totalorder %s113, %s114
      %p128 = scmp.eq.s32.totalorder %s22, 1
      %p129 = por %p127, %p128
      %p131 = scmp.ne.s32.totalorder %s114, %s130
      %p132 = scmp.eq.s32.totalorder %s22, 0
      %p133 = por %p131, %p132
      %p134 = scmp.le.s32.totalorder 1, %s16
      %p135 = scmp.lt.s32.totalorder %s16, 3
      %p136 = pnand %p134, %p135
      %p137 = pneg %p136
      // Predicated region
      $region9: #{tpu_custom_call.1} parent=5 // pred_check
        _
      $region10: #{tpu_custom_call.1} parent=5 // pred_check_branch
        %139 = sbr.rel (%p136) target = $region12
      $region11: #{tpu_custom_call.1} parent=5 // pred_region
        %s140 = ssub.s32 %s16, 1
        // Predicated region
        $region13: #{tpu_custom_call.1} parent=11 // pred_check
          %p141 = pneg %p77
        $region14: #{tpu_custom_call.1} parent=11 // pred_check_branch
          %143 = sbr.rel (%p141) target = $region16
        $region15: #{tpu_custom_call.1} parent=11 // pred_region
          %145 = vsyncadd [#allocation6], 0
          %s146 = sshll.u32 %s1, 4
          %s147 = int_to_ptr.hbm [resolvable:$true] %s146
          %s148 = sshll.u32 [#allocation5], 4
          %s149 = int_to_ptr.vmem [resolvable:$true] %s148
          %154 = dma.hbm_to_vmem [thread:$0]  %s147, 256, %s149, [#allocation6], 64, 64, 4
        $region16: #{tpu_custom_call.1} parent=11 // pred_fallthru
          _
        // Predicated region
        $region17: #{tpu_custom_call.1} parent=11 // pred_check
          %p155 = pneg %p98
        $region18: #{tpu_custom_call.1} parent=11 // pred_check_branch
          %157 = sbr.rel (%p155) target = $region20
        $region19: #{tpu_custom_call.1} parent=11 // pred_region
          _
        $region20: #{tpu_custom_call.1} parent=11 // pred_fallthru
          _
      $region12: #{tpu_custom_call.1} parent=5 // pred_fallthru
        _
      %p158 = scmp.lt.s32.totalorder %s16, 2
      // Predicated region
      $region21: #{tpu_custom_call.1} parent=5 // pred_check
        %p159 = pneg %p158
      $region22: #{tpu_custom_call.1} parent=5 // pred_check_branch
        %161 = sbr.rel (%p159) target = $region24
      $region23: #{tpu_custom_call.1} parent=5 // pred_region
        // Predicated region
        $region25: #{tpu_custom_call.1} parent=23 // pred_check
          %p162 = pneg %p50
        $region26: #{tpu_custom_call.1} parent=23 // pred_check_branch
          %164 = sbr.rel (%p162) target = $region28
        $region27: #{tpu_custom_call.1} parent=23 // pred_region
          %s165 = sand.u32 %s40, 1
          %s166 = scalar_lea.sflag [#allocation3], %s165
          %s167 = sand.u32 %s40, 1
          %s168 = smul.addr %s167, 4
          %s169 = scalar_lea.vmem [#allocation2], %s168
          %171 = vsyncadd %s166, 0
          %s172 = sadd.s32 %s24, %s23
          %s173 = smul.addr %s172, 4
          %s174 = scalar_lea.hbm %s0, %s173
          %s176 = sshll.u32 %s174, 4
          %s177 = int_to_ptr.hbm [resolvable:$true] %s176
          %s178 = sshll.u32 %s169, 4
          %s179 = int_to_ptr.vmem [resolvable:$true] %s178
          %181 = dma.hbm_to_vmem [thread:$0]  %s177, 64, %s179, %s166
        $region28: #{tpu_custom_call.1} parent=23 // pred_fallthru
          _
      $region24: #{tpu_custom_call.1} parent=5 // pred_fallthru
        _
      %p182 = scmp.le.s32.totalorder 1, %s16
      %p183 = scmp.lt.s32.totalorder %s16, 3
      %p184 = pnand %p182, %p183
      %p185 = pneg %p184
      // Predicated region
      $region29: #{tpu_custom_call.1} parent=5 // pred_check
        _
      $region30: #{tpu_custom_call.1} parent=5 // pred_check_branch
        %187 = sbr.rel (%p184) target = $region32
      $region31: #{tpu_custom_call.1} parent=5 // pred_region
        %s188 = ssub.s32 %s16, 1
        %s189 = sand.u32 %s43, 1
        %s190 = scalar_lea.sflag [#allocation3], %s189
        %s191 = sand.u32 %s43, 1
        %s192 = smul.addr %s191, 4
        %s193 = scalar_lea.vmem [#allocation2], %s192
        // Predicated region
        $region33: #{tpu_custom_call.1} parent=31 // pred_check
          %p194 = pneg %p56
        $region34: #{tpu_custom_call.1} parent=31 // pred_check_branch
          %196 = sbr.rel (%p194) target = $region36
        $region35: #{tpu_custom_call.1} parent=31 // pred_region
          %198 = dma.done %s190, 64
        $region36: #{tpu_custom_call.1} parent=31 // pred_fallthru
          _
        // Predicated region
        $region37: #{tpu_custom_call.1} parent=31 // pred_check
          %p199 = pneg %p77
        $region38: #{tpu_custom_call.1} parent=31 // pred_check_branch
          %201 = sbr.rel (%p199) target = $region40
        $region39: #{tpu_custom_call.1} parent=31 // pred_region
          %203 = dma.done [#allocation6], 256
        $region40: #{tpu_custom_call.1} parent=31 // pred_fallthru
          _
        %s204 = sand.u32 %s43, 1
        %s205 = scalar_lea.sflag [#allocation3], %s204
        %s206 = sand.u32 %s43, 1
        %s207 = smul.addr %s206, 4
        %s208 = scalar_lea.vmem [#allocation2], %s207
        %p209 = pneg %p56
        %p210 = pneg %p53
        %p211 = pneg %p77
        %p212 = pneg %p74
        %p213 = pneg %p98
        %p214 = pneg %p95
        %p215 = pneg %p126
        %p216 = pneg %p123
        %s217 = sand.u32 %s113, 1
        %s218 = scalar_lea.sflag [#allocation4], %s217
        %s219 = sand.u32 %s113, 1
        %s220 = smul.addr %s219, 16
        %s221 = scalar_lea.vmem [#allocation7], %s220
        %v223 = vld [vmem:[%s193] sm:$0xf]
        %v224 = vld [vmem:[#allocation5] sm:$0xf]
        %v225 = vld [vmem:[#allocation5 + $0x4] sm:$0xf]
        %v226 = vld [vmem:[#allocation5 + $0x8] sm:$0xf]
        %v227 = vld [vmem:[#allocation5 + $0xc] sm:$0xf]
        %v228 = vld [vmem:[%s2] sm:$0x1]
        %v230 = vperm.slane %v228, 0
        %v236 = vunpack.c.l.b16 %v224
        %v237 = vunpack.c.l.b16 %v225
        %v238 = vunpack.c.l.b16 %v226
        %v239 = vunpack.c.l.b16 %v227
        %v240 = vpack.c.b16 %v237, %v236
        %v241 = vpack.c.b16 %v239, %v238
        %vm244 = vcmask 261120
        %v246 = vsel %vm244, %v223, 0
        %248 = vmatpush.bf16.msra.mxu0 0
        %249 = vmatpush.bf16.msra.mxu0 0
        %250 = vmatpush.bf16.msra.mxu0 0
        %251 = vmatpush.bf16.msra.mxu0 0
        %252 = vmatpush.bf16.msra.mxu0 0
        %253 = vmatpush.bf16.msra.mxu0 0
        %254 = vmatpush.bf16.msra.mxu0 %v241
        %255 = vmatpush.bf16.msra.mxu0 %v240
        %256 = vmatmul.bf16.gmra.mxu0 %v246
        %v257 = vpop.f32.mrf.mxu0
        %v258 = vadd.f32 %v230, %v257
        %v259 = vpop.f32.mrf.mxu0
        %260 = vdwg.mxu0
        %v261 = vpack.c.bf16 %v258, %v258
        %vm262 = vcmask 60416
        %263 = vst.msk [vmem:[%s221] sm:$0xf] %vm262, %v261
        %265 = vrot.lane.b32.xlu0 %v261, 120
        %v266 = vpop.permute.xlu0 %265
        %s268 = scalar_lea.vmem %s221, 4 [#allocation7]
        %269 = vst.msk [vmem:[%s268] sm:$0xf] %vm262, %v266
        %270 = vrot.lane.b32.xlu0 %v261, 112
        %v271 = vpop.permute.xlu0 %270
        %s273 = scalar_lea.vmem %s221, 8 [#allocation7]
        %274 = vst.msk [vmem:[%s273] sm:$0xf] %vm262, %v271
        %275 = vrot.lane.b32.xlu0 %v261, 104
        %v276 = vpop.permute.xlu0 %275
        %s278 = scalar_lea.vmem %s221, 12 [#allocation7]
        %279 = vst.msk [vmem:[%s278] sm:$0xf] %vm262, %v276
        %s280 = sand.u32 %s113, 1
        %s281 = scalar_lea.sflag [#allocation4], %s280
        %s282 = sand.u32 %s113, 1
        %s283 = smul.addr %s282, 16
        %s284 = scalar_lea.vmem [#allocation7], %s283
        // Predicated region
        $region41: #{tpu_custom_call.1} parent=31 // pred_check
          %p285 = pneg %p123
        $region42: #{tpu_custom_call.1} parent=31 // pred_check_branch
          %287 = sbr.rel (%p285) target = $region44
        $region43: #{tpu_custom_call.1} parent=31 // pred_region
          %289 = vsyncadd %s281, 0
          %s290 = smul.addr %s25, 4
          %s291 = sadd.s32 %s26, %s290
          %s292 = smul.addr %s291, 4
          %s293 = scalar_lea.hbm %s3, %s292
          %s294 = sshll.u32 %s284, 4
          %s295 = int_to_ptr.vmem [resolvable:$true] %s294
          %s296 = sshll.u32 %s293, 4
          %s297 = int_to_ptr.hbm [resolvable:$true] %s296
          %302 = dma.vmem_to_hbm [thread:$0]  %s295, 256, %s297, %s281, 64, 64, 4
        $region44: #{tpu_custom_call.1} parent=31 // pred_fallthru
          _
      $region32: #{tpu_custom_call.1} parent=5 // pred_fallthru
        _
      %p303 = scmp.le.s32.totalorder 2, %s16
      // Predicated region
      $region45: #{tpu_custom_call.1} parent=5 // pred_check
        %p304 = pneg %p303
      $region46: #{tpu_custom_call.1} parent=5 // pred_check_branch
        %306 = sbr.rel (%p304) target = $region48
      $region47: #{tpu_custom_call.1} parent=5 // pred_region
        %s307 = ssub.s32 %s16, 2
        // Predicated region
        $region49: #{tpu_custom_call.1} parent=47 // pred_check
          %p308 = pneg %p129
        $region50: #{tpu_custom_call.1} parent=47 // pred_check_branch
          %310 = sbr.rel (%p308) target = $region52
        $region51: #{tpu_custom_call.1} parent=47 // pred_region
          %s311 = sand.u32 %s114, 1
          %s312 = scalar_lea.sflag [#allocation4], %s311
          %s313 = sand.u32 %s114, 1
          %s314 = smul.addr %s313, 16
          %s315 = scalar_lea.vmem [#allocation7], %s314
          %317 = dma.done %s312, 256
        $region52: #{tpu_custom_call.1} parent=47 // pred_fallthru
          _
      $region48: #{tpu_custom_call.1} parent=5 // pred_fallthru
        _
    $region6: #{tpu_custom_call.1} parent=1 // loop_footer
      %s20 = sadd.s32 1, %s16
    $region7: #{tpu_custom_call.1} parent=1 // loop_footer_branch
      %15 = sbr.rel target = $region3
    $region8: #{tpu_custom_call.1} parent=1 // loop_exit
      _
    %318 = vsyncpa [#allocation3], 1
    %s319 = scalar_lea.sflag [#allocation3], 1
    %320 = vsyncpa %s319, 1
    %321 = vsyncpa [#allocation6], 1
    %322 = vsyncpa [#allocation4], 1
    %s323 = scalar_lea.sflag [#allocation4], 1
    %324 = vsyncpa %s323, 1

</llo_original>
